<compile_context>
chip_gen: v5e
topology: v5e:2x2
jax: 0.10.0
libtpu: 0.0.40
codegen_flags: <defaults>
</compile_context>

<pallas_src>
import functools

import jax
import jax.numpy as jnp
from jax.experimental import pallas as pl
from jax.experimental.pallas import tpu as pltpu


def _mlp_kernel(x_ref, w1p_ref, w2p_ref, o_ref, *, in_dim, hidden, matmul_dtype):
    # Unpack weights / biases from the packed blobs (static slices).
    w1 = w1p_ref[:in_dim, :]                    # [in, hidden]
    b1 = w1p_ref[in_dim:in_dim + 1, :]          # [1, hidden]
    w2 = w2p_ref[:hidden, :]                    # [hidden, out]
    b2 = w2p_ref[hidden:hidden + 1, :]          # [1, out]

    x = x_ref[...]                              # [tile_B, in]

    # fc1: MXU matmul (optionally bf16 operands, always f32 accumulate),
    # bias add + tanh kept in f32 (VPU/EUP native on all generations).
    h = jnp.dot(x.astype(matmul_dtype), w1.astype(matmul_dtype),
                preferred_element_type=jnp.float32)
    h = jnp.tanh(h + b1)

    # fc2 + bias.
    out = jnp.dot(h.astype(matmul_dtype), w2.astype(matmul_dtype),
                  preferred_element_type=jnp.float32)
    o_ref[...] = (out + b2).astype(o_ref.dtype)


def pack_params(w1, b1, w2, b2):
    """Pack bias as an extra trailing row of each weight matrix (done once)."""
    w1p = jnp.concatenate([w1, b1.reshape(1, -1)], axis=0)   # [in+1, hidden]
    w2p = jnp.concatenate([w2, b2.reshape(1, -1)], axis=0)   # [hidden+1, out]
    return w1p, w2p


def mlp_forward(x, w1_packed, w2_packed, *, use_bf16_matmul=False, batch_tile=512):
    """x: [B, in_dim] f32.  Returns squeeze([B, out_dim]) f32."""
    B, in_dim = x.shape
    hidden = w1_packed.shape[1]
    out_dim = w2_packed.shape[1]
    assert w1_packed.shape[0] == in_dim + 1
    assert w2_packed.shape[0] == hidden + 1

    kernel = functools.partial(
        _mlp_kernel,
        in_dim=in_dim,
        hidden=hidden,
        matmul_dtype=jnp.bfloat16 if use_bf16_matmul else jnp.float32,
    )
    vmem = pltpu.MemorySpace.VMEM

    if B > batch_tile and B % batch_tile == 0:
        # Large-batch rollout path: tile the batch axis; weights stay pinned
        # to block (0,0) across every grid step; batch axis is "parallel"
        # (independent rows -> megacore sharding on v7x).
        out = pl.pallas_call(
            kernel,
            out_shape=jax.ShapeDtypeStruct((B, out_dim), jnp.float32),
            grid=(B // batch_tile,),
            in_specs=[
                pl.BlockSpec((batch_tile, in_dim), lambda i: (i, 0)),      # x tile
                pl.BlockSpec((in_dim + 1, hidden), lambda i: (0, 0)),      # [w1; b1]
                pl.BlockSpec((hidden + 1, out_dim), lambda i: (0, 0)),     # [w2; b2]
            ],
            out_specs=pl.BlockSpec((batch_tile, out_dim), lambda i: (i, 0)),
            compiler_params=pltpu.CompilerParams(
                dimension_semantics=("parallel",)),
        )(x, w1_packed, w2_packed)
    else:
        # Small-batch path: no grid, no pipeline machinery, whole arrays in VMEM.
        out = pl.pallas_call(
            kernel,
            out_shape=jax.ShapeDtypeStruct((B, out_dim), jnp.float32),
            in_specs=[
                pl.BlockSpec(memory_space=vmem),   # x
                pl.BlockSpec(memory_space=vmem),   # [w1; b1]
                pl.BlockSpec(memory_space=vmem),   # [w2; b2]
            ],
            out_specs=pl.BlockSpec(memory_space=vmem),
        )(x, w1_packed, w2_packed)

    # PyTorch: out.squeeze()
    return jnp.squeeze(out)


def init_params(key, in_dim, out_dim, hidden=32):
    """Deterministic init mimicking nn.Linear default (U(-1/sqrt(fan_in), ...))."""
    k1, k2, k3, k4 = jax.random.split(key, 4)
    bound1 = 1.0 / jnp.sqrt(in_dim)
    bound2 = 1.0 / jnp.sqrt(hidden)
    # stored as [in, out] (pre-transposed relative to torch's [out, in])
    w1 = jax.random.uniform(k1, (in_dim, hidden), jnp.float32, -bound1, bound1)
    b1 = jax.random.uniform(k2, (hidden,), jnp.float32, -bound1, bound1)
    w2 = jax.random.uniform(k3, (hidden, out_dim), jnp.float32, -bound2, bound2)
    b2 = jax.random.uniform(k4, (out_dim,), jnp.float32, -bound2, bound2)
    return w1, b1, w2, b2


def _ref_forward(x, w1, b1, w2, b2):
    return jnp.squeeze(jnp.tanh(x @ w1 + b1) @ w2 + b2)


if __name__ == "__main__":
    key = jax.random.PRNGKey(0)
    kx, kp, kb = jax.random.split(key, 3)

    # Small VPG-style problem: batch of 8 observations, in_dim=4, out_dim=2.
    B, in_dim, out_dim = 8, 4, 2
    x = jax.random.normal(kx, (B, in_dim), dtype=jnp.float32)
    w1, b1, w2, b2 = init_params(kp, in_dim, out_dim)
    w1p, w2p = pack_params(w1, b1, w2, b2)

    ref = _ref_forward(x, w1, b1, w2, b2)

    # f32 small-batch path (exact-ish match expected).
    out = jax.block_until_ready(mlp_forward(x, w1p, w2p))
    assert out.shape == ref.shape
    assert jnp.allclose(out, ref, atol=1e-5, rtol=1e-5), "f32 mismatch vs reference"

    # bf16-matmul path (v6e/v7x MXU-friendly); looser tolerance per bf16 precision.
    out_bf16 = jax.block_until_ready(mlp_forward(x, w1p, w2p, use_bf16_matmul=True))
    assert out_bf16.shape == ref.shape
    assert jnp.allclose(out_bf16, ref, atol=5e-2, rtol=5e-2), "bf16 mismatch vs reference"

    # Large-batch (rollout) path: exercises the batch-tiled, parallel-grid kernel.
    Bb = 1024
    xb = jax.random.normal(kb, (Bb, in_dim), dtype=jnp.float32)
    refb = _ref_forward(xb, w1, b1, w2, b2)
    outb = jax.block_until_ready(mlp_forward(xb, w1p, w2p, batch_tile=512))
    assert outb.shape == refb.shape
    assert jnp.allclose(outb, refb, atol=1e-5, rtol=1e-5), "tiled f32 mismatch vs reference"

    # TODO(synk): generate_action's LogSoftmax + multinomial sampling is host-side
    # glue around forward() and is not part of this kernel.
    print("KERNEL_OK")
</pallas_src>

<mosaic_0001>
module attributes {stable_mosaic.version = 11 : i64} {
  func.func @_mlp_kernel(%arg0: memref<8x4xf32, #tpu.memory_space<vmem>>, %arg1: memref<5x32xf32, #tpu.memory_space<vmem>>, %arg2: memref<33x2xf32, #tpu.memory_space<vmem>>, %arg3: memref<8x2xf32, #tpu.memory_space<vmem>>) attributes {dimension_semantics = [], scalar_prefetch = 0 : i64, scratch_operands = 0 : i64, tpu.core_type = #tpu.core_type<tc>} {
    %c0 = arith.constant 0 : index
    %c0_0 = arith.constant 0 : index
    %0 = vector.load %arg1[%c0, %c0_0] : memref<5x32xf32, #tpu.memory_space<vmem>>, vector<4x32xf32>
    %c4 = arith.constant 4 : index
    %c0_1 = arith.constant 0 : index
    %1 = vector.load %arg1[%c4, %c0_1] : memref<5x32xf32, #tpu.memory_space<vmem>>, vector<1x32xf32>
    %c0_2 = arith.constant 0 : index
    %c0_3 = arith.constant 0 : index
    %2 = vector.load %arg2[%c0_2, %c0_3] : memref<33x2xf32, #tpu.memory_space<vmem>>, vector<32x2xf32>
    %c32 = arith.constant 32 : index
    %c0_4 = arith.constant 0 : index
    %3 = vector.load %arg2[%c32, %c0_4] : memref<33x2xf32, #tpu.memory_space<vmem>>, vector<1x2xf32>
    %c0_5 = arith.constant 0 : index
    %c0_6 = arith.constant 0 : index
    %4 = vector.load %arg0[%c0_5, %c0_6] : memref<8x4xf32, #tpu.memory_space<vmem>>, vector<8x4xf32>
    %cst = arith.constant dense<0.000000e+00> : vector<8x32xf32>
    %5 = tpu.matmul %4, %0, %cst {dimension_numbers = #tpu.dot_dimension_numbers<[1], [0], [0], [1], [0, 0, 1, 1], [], []>} : vector<8x4xf32>, vector<4x32xf32>, vector<8x32xf32> -> vector<8x32xf32>
    %6 = vector.broadcast %1 : vector<1x32xf32> to vector<8x32xf32>
    %7 = arith.addf %5, %6 : vector<8x32xf32>
    %8 = math.tanh %7 : vector<8x32xf32>
    %cst_7 = arith.constant dense<0.000000e+00> : vector<8x2xf32>
    %9 = tpu.matmul %8, %2, %cst_7 {dimension_numbers = #tpu.dot_dimension_numbers<[1], [0], [0], [1], [0, 0, 1, 1], [], []>} : vector<8x32xf32>, vector<32x2xf32>, vector<8x2xf32> -> vector<8x2xf32>
    %10 = vector.broadcast %3 : vector<1x2xf32> to vector<8x2xf32>
    %11 = arith.addf %9, %10 : vector<8x2xf32>
    %c0_8 = arith.constant 0 : index
    %c0_9 = arith.constant 0 : index
    %12 = vector.load %arg3[%c0_8, %c0_9] : memref<8x2xf32, #tpu.memory_space<vmem>>, vector<8x2xf32>
    tpu.vector_store %arg3[%c0_8, %c0_9], %11 {strides = array<i32>} : memref<8x2xf32, #tpu.memory_space<vmem>>, vector<8x2xf32>,
    return
  }
}

</mosaic_0001>

<llo_original>
// kernel: tpu_custom_call.1
$region0: #{tpu_custom_call.1}
  #allocation0 [shape = 'u32[]', space=smem, size = 0x4, offset = 0x4, fixed_abs, tag = 'smem constant byte address 0x4 - core index']
  #allocation1 [shape = 'u32[72,128]{1,0:T(1,128)}', space=vmem, size = 0x9000, scoped, tag = 'internal scratch']
  %s0 = inlined_call_operand.vmem [shape: f32[8,4], index: 0, kind: input, shape index: {}]
  %s1 = inlined_call_operand.vmem [shape: f32[5,32], index: 1, kind: input, shape index: {}]
  %s2 = inlined_call_operand.vmem [shape: f32[33,2], index: 2, kind: input, shape index: {}]
  %s3 = inlined_call_operand.vmem [shape: f32[8,2], index: 3, kind: output, shape index: {}]
  %s4 = sld [smem:[#allocation0]]
  $region22: #{tpu_custom_call.1} parent=0
    _
  %s6 = ssub.s32 1, %s4
  %s7 = scalar_select 0, %s6, %s4
  // Predicated region
  $region2: #{tpu_custom_call.1} parent=0 // pred_check
    _
  $region3: #{tpu_custom_call.1} parent=0 // pred_check_branch
    %9 = sbr.rel (0) target = $region5
  $region4: #{tpu_custom_call.1} parent=0 // pred_region
    _
  $region5: #{tpu_custom_call.1} parent=0 // pred_fallthru
    _
  // Predicated region
  $region6: #{tpu_custom_call.1} parent=0 // pred_check
    _
  $region7: #{tpu_custom_call.1} parent=0 // pred_check_branch
    %11 = sbr.rel (0) target = $region9
  $region8: #{tpu_custom_call.1} parent=0 // pred_region
    _
  $region9: #{tpu_custom_call.1} parent=0 // pred_fallthru
    _
  // Predicated region
  $region10: #{tpu_custom_call.1} parent=0 // pred_check
    _
  $region11: #{tpu_custom_call.1} parent=0 // pred_check_branch
    %13 = sbr.rel (0) target = $region13
  $region12: #{tpu_custom_call.1} parent=0 // pred_region
    _
  $region13: #{tpu_custom_call.1} parent=0 // pred_fallthru
    _
  %v14 = vld [vmem:[%s1] sm:$0xf]
  %v15 = vld [vmem:[%s1 + $0x4] sm:$0x1]
  %v16 = vld [vmem:[%s2] sm:$0xff]
  %v17 = vld [vmem:[%s2 + $0x8] sm:$0xff]
  %v18 = vld [vmem:[%s2 + $0x10] sm:$0xff]
  %v19 = vld [vmem:[%s2 + $0x18] sm:$0xff]
  %v20 = vld [vmem:[%s2 + $0x20] sm:$0x1]
  %v21 = vld [vmem:[%s0] sm:$0xff]
  %v22 = vperm.slane %v15, 0
  %vm23 = vcmask 31744
  %v25 = vsel %vm23, %v21, 0
  %vm27 = vcmask 1043456
  %v29 = vsel %vm27, %v14, 0
  %31 = vmatpush.msra.mxu0 0.0
  %32 = vmatpush.msra.mxu0 0.0
  %33 = vmatpush.msra.mxu0 0.0
  %34 = vmatpush.msra.mxu0 0.0
  %35 = vmatpush.msra.mxu0 0.0
  %36 = vmatpush.msra.mxu0 0.0
  %37 = vmatpush.msra.mxu0 0.0
  %38 = vmatpush.msra.mxu0 0.0
  %39 = vmatpush.msra.mxu0 0.0
  %40 = vmatpush.msra.mxu0 0.0
  %41 = vmatpush.msra.mxu0 0.0
  %42 = vmatpush.msra.mxu0 0.0
  %43 = vmatpush.msra.mxu0 0.0
  %44 = vmatpush.msra.mxu0 0.0
  %45 = vmatpush.msra.mxu0 0.0
  %46 = vmatpush.msra.mxu0 %v29
  %47 = vmatmul.f32.gmra.mxu0 %v25
  %v48 = vpop.f32.mrf.mxu0
  %v49 = vadd.f32 %v22, %v48
  %50 = vdwg.mxu0
  %v51 = vtanh.pop %v49
  %v52 = vperm.slane %v20, 0
  %vm53 = vcmask 261120
  %v55 = vsel %vm53, %v51, 0
  %57 = vmatpush.msra.mxu0 0.0
  %58 = vmatpush.msra.mxu0 0.0
  %59 = vmatpush.msra.mxu0 0.0
  %60 = vmatpush.msra.mxu0 0.0
  %61 = vmatpush.msra.mxu0 0.0
  %62 = vmatpush.msra.mxu0 0.0
  %63 = vmatpush.msra.mxu0 0.0
  %64 = vmatpush.msra.mxu0 0.0
  %65 = vmatpush.msra.mxu0 0.0
  %66 = vmatpush.msra.mxu0 0.0
  %67 = vmatpush.msra.mxu0 0.0
  %68 = vmatpush.msra.mxu0 0.0
  %69 = vmatpush.msra.mxu0 %v19
  %70 = vmatpush.msra.mxu0 %v18
  %71 = vmatpush.msra.mxu0 %v17
  %72 = vmatpush.msra.mxu0 %v16
  %73 = vmatmul.f32.gmra.mxu0 %v55
  %v74 = vpop.f32.mrf.mxu0
  %v75 = vadd.f32 %v52, %v74
  %76 = vdwg.mxu0
  %vm77 = vcmask 15360
  %78 = vst.msk [vmem:[%s3] sm:$0xff] %vm77, %v75
  // Predicated region
  $region14: #{tpu_custom_call.1} parent=0 // pred_check
    _
  $region15: #{tpu_custom_call.1} parent=0 // pred_check_branch
    %80 = sbr.rel (0) target = $region17
  $region16: #{tpu_custom_call.1} parent=0 // pred_region
    _
  $region17: #{tpu_custom_call.1} parent=0 // pred_fallthru
    _
  // Predicated region
  $region18: #{tpu_custom_call.1} parent=0 // pred_check
    _
  $region19: #{tpu_custom_call.1} parent=0 // pred_check_branch
    %82 = sbr.rel (0) target = $region21
  $region20: #{tpu_custom_call.1} parent=0 // pred_region
    _
  $region21: #{tpu_custom_call.1} parent=0 // pred_fallthru
    _

</llo_original>
